<compile_context>
chip_gen: v7x
topology: tpu7x:2x2x1
jax: 0.10.0
libtpu: 0.0.40
codegen_flags: <defaults>
</compile_context>

<pallas_src>
import jax
import jax.numpy as jnp
from jax.experimental import pallas as pl
from jax.experimental.pallas import tpu as pltpu

LANES = 128                       # minimum lane width
TILE_BYTES = 4 * 1024 * 1024      # ~4 MiB per input tile (per perf review)
VMEM_LIMIT_BYTES = 32 * 1024 * 1024   # covers in+out double-buffering on all gens
SMALL_N_THRESHOLD = 4096          # below this, XLA fused multiply beats kernel launch


def _scalar_mul_kernel(w_ref, x_ref, o_ref):
    # w_ref: (1, 1) float32 scalar in SMEM; x_ref/o_ref: (tile_r, W) VMEM tile.
    w = w_ref[0, 0]                                   # 32-bit scalar path
    o_ref[...] = (x_ref[...].astype(jnp.float32) * w).astype(o_ref.dtype)


def _pallas_scalar_mul(w_f32, x2d, out_dtype, tile_r):
    rows, width = x2d.shape
    grid = (pl.cdiv(rows, tile_r),)
    n_main = rows * width
    return pl.pallas_call(
        _scalar_mul_kernel,
        out_shape=jax.ShapeDtypeStruct((rows, width), out_dtype),
        grid=grid,
        in_specs=[
            pl.BlockSpec(memory_space=pltpu.SMEM),            # w scalar (f32 in SMEM)
            pl.BlockSpec((tile_r, width), lambda i: (i, 0)),  # x row-tile
        ],
        out_specs=pl.BlockSpec((tile_r, width), lambda i: (i, 0)),
        compiler_params=pltpu.CompilerParams(
            dimension_semantics=("parallel",),
            vmem_limit_bytes=VMEM_LIMIT_BYTES,
        ),
        cost_estimate=pl.CostEstimate(
            flops=n_main,
            transcendentals=0,
            bytes_accessed=n_main * (x2d.dtype.itemsize + jnp.dtype(out_dtype).itemsize),
        ),
    )(w_f32, x2d)


def tensor_cpu_forward(w, x):
    """Pallas implementation of TestTensorCpu.forward: broadcast w * x."""
    out_dtype = jnp.result_type(w.dtype, x.dtype)   # torch promotion semantics
    w_f32 = w.astype(jnp.float32).reshape(1, 1)
    n = x.size

    if n == 0:
        return jnp.zeros(x.shape, out_dtype)

    # Small-n fast path: launch overhead dominates, XLA fused mul is at roofline.
    if n <= SMALL_N_THRESHOLD:
        return (w_f32[0, 0] * x).astype(out_dtype)

    x_flat = jnp.ravel(x)
    rem = n % LANES
    n_main = n - rem                    # 128-aligned prefix handled by the kernel

    # Widest lane dimension that evenly divides the aligned prefix.
    width = LANES
    for cand in (1024, 512, 256):
        if n_main % cand == 0:
            width = cand
            break
    rows = n_main // width

    # Row tile: dtype-packed sublane multiple, ~TILE_BYTES per tile, capped at
    # the (rounded-up) row count so small inputs use a single block.
    itemsize = x.dtype.itemsize
    sub = max(8, 32 // itemsize)        # 8 for f32, 16 for bf16, 32 for int8/fp8
    tile_elems = TILE_BYTES // itemsize
    tile_r = max(sub, (tile_elems // width) // sub * sub)
    rows_up = -(-rows // sub) * sub
    tile_r = min(tile_r, rows_up)

    x_main = x_flat if rem == 0 else x_flat[:n_main]
    out_main = _pallas_scalar_mul(w_f32, x_main.reshape(rows, width), out_dtype, tile_r)
    out_flat = out_main.reshape(-1)

    if rem != 0:
        # <128-element tail: tiny jnp multiply, no full-array pad/slice round-trips.
        out_tail = (w_f32[0, 0] * x_flat[n_main:]).astype(out_dtype)
        out_flat = jnp.concatenate([out_flat, out_tail])

    return out_flat.reshape(x.shape)


if __name__ == "__main__":
    key = jax.random.PRNGKey(0)
    kw, k1, k2, k3 = jax.random.split(key, 4)

    # Deterministic "parameter" standing in for torch.randn(1, device='cuda').
    w = jax.random.normal(kw, (1,), dtype=jnp.float32)

    def ref(w_, x_):
        return (w_.astype(jnp.float32)[0] * x_).astype(jnp.result_type(w_.dtype, x_.dtype))

    # 1) Module-scale small input (fast path).
    x1 = jax.random.normal(k1, (2, 4, 16, 16), dtype=jnp.float32)
    o1 = jax.block_until_ready(tensor_cpu_forward(w, x1))
    assert o1.shape == x1.shape and o1.dtype == x1.dtype
    assert jnp.allclose(o1, ref(w, x1), atol=1e-6, rtol=1e-6)

    # 2) Larger aligned input exercising the Pallas kernel (wide 1024-lane path).
    x2 = jax.random.normal(k2, (8, 4, 64, 64), dtype=jnp.float32)
    o2 = jax.block_until_ready(tensor_cpu_forward(w, x2))
    assert o2.shape == x2.shape and o2.dtype == x2.dtype
    assert jnp.allclose(o2, ref(w, x2), atol=1e-6, rtol=1e-6)

    # 3) Ragged size: aligned prefix through the kernel, <128-element tail in jnp.
    x3 = jax.random.normal(k3, (517, 130), dtype=jnp.float32)
    o3 = jax.block_until_ready(tensor_cpu_forward(w, x3))
    assert o3.shape == x3.shape and o3.dtype == x3.dtype
    assert jnp.allclose(o3, ref(w, x3), atol=1e-6, rtol=1e-6)

    print("KERNEL_OK")
</pallas_src>

<mosaic_0001>
module attributes {stable_mosaic.version = 11 : i64} {
  func.func @_scalar_mul_kernel(%arg0: i32, %arg1: memref<1x1xf32, #tpu.memory_space<smem>>, %arg2: memref<128x1024xf32, #tpu.memory_space<vmem>>, %arg3: memref<128x1024xf32, #tpu.memory_space<vmem>>) attributes {dimension_semantics = [#tpu.dimension_semantics<parallel>], iteration_bounds = array<i64: 1>, scalar_prefetch = 0 : i64, scratch_operands = 0 : i64, tpu.core_type = #tpu.core_type<tc>, window_params = [{transform_indices = @transform_0, window_bounds = array<i64: 1, 1>}, {transform_indices = @transform_1, window_bounds = array<i64: 128, 1024>}, {transform_indices = @transform_2, window_bounds = array<i64: 128, 1024>}]} {
    %c0 = arith.constant 0 : index
    %c0_0 = arith.constant 0 : index
    %0 = memref.load %arg1[%c0, %c0_0] : memref<1x1xf32, #tpu.memory_space<smem>>
    %c0_1 = arith.constant 0 : index
    %c0_2 = arith.constant 0 : index
    %1 = vector.load %arg2[%c0_1, %c0_2] : memref<128x1024xf32, #tpu.memory_space<vmem>>, vector<128x1024xf32>
    %2 = vector.broadcast %0 : f32 to vector<128x1024xf32>
    %3 = arith.mulf %1, %2 : vector<128x1024xf32>
    %c0_3 = arith.constant 0 : index
    %c0_4 = arith.constant 0 : index
    %4 = vector.load %arg3[%c0_3, %c0_4] : memref<128x1024xf32, #tpu.memory_space<vmem>>, vector<128x1024xf32>
    tpu.vector_store %arg3[%c0_3, %c0_4], %3 {strides = array<i32>} : memref<128x1024xf32, #tpu.memory_space<vmem>>, vector<128x1024xf32>,
    return
  }
  func.func @transform_0(%arg0: i32) -> (i32, i32) {
    %c0_i32 = arith.constant 0 : i32
    %c0_i32_0 = arith.constant 0 : i32
    %c0_i32_1 = arith.constant 0 : i32
    return %c0_i32, %c0_i32_0 : i32, i32
  }
  func.func @transform_1(%arg0: i32) -> (i32, i32) {
    %c0_i32 = arith.constant 0 : i32
    %c0_i32_0 = arith.constant 0 : i32
    return %arg0, %c0_i32 : i32, i32
  }
  func.func @transform_2(%arg0: i32) -> (i32, i32) {
    %c0_i32 = arith.constant 0 : i32
    %c0_i32_0 = arith.constant 0 : i32
    return %arg0, %c0_i32 : i32, i32
  }
}

</mosaic_0001>

<llo_original>
// kernel: tpu_custom_call.1
$region0: #{tpu_custom_call.1}
  #allocation0 [shape = 'u32[]', space=smem, size = 0x4, offset = 0x4, fixed_abs, tag = 'smem constant byte address 0x4 - core index']
  #allocation1 [shape = 'u32[144,128]{1,0:T(1,128)}', space=vmem, size = 0x12000, scoped, tag = 'internal scratch']
  #allocation2 [shape = 'f32[1,1]{1,0:T(1,128)S(6)}', space=smem, size = 0x200, scoped, tag = 'scoped memory for tpu_custom_call.1']
  %s0 = inlined_call_operand.<no memory space> [shape: f32[1,1], index: 0, kind: input, shape index: {}]
  %s1 = inlined_call_operand.hbm [shape: f32[128,1024], index: 1, kind: input, shape index: {}]
  %s2 = inlined_call_operand.hbm [shape: f32[128,1024], index: 2, kind: output, shape index: {}]
  %s3 = sld [smem:[#allocation0]]
  $region22: #{tpu_custom_call.1} parent=0
    _
  %s5 = ssub.s32 1, %s3
  %s6 = scalar_select 0, %s5, %s3
  %7 = sst [smem:[#allocation2]] %s0
  $region1: #{tpu_custom_call.1} parent=0
    #allocation3 [shape = 'u8[524288]{0}', space=vmem, size = 0x80000, scoped, tag = 'input window, operand 1, single buffered']
    #allocation4 [shape = 's32[1]{0}', space=sflag, size = 0x4, scoped, tag = 'scoped memory for tpu_custom_call.1']
    #allocation5 [shape = 's32[1]{0}', space=sflag, size = 0x4, scoped, tag = 'scoped memory for tpu_custom_call.1']
    #allocation6 [shape = 'u8[524288]{0}', space=vmem, size = 0x80000, scoped, tag = 'output window, operand 0, single buffered']
    %8 = vsyncpa [#allocation4], 0
    %9 = vsyncpa [#allocation5], 0
    // Predicated region
    $region2: #{tpu_custom_call.1} parent=1 // pred_check
      _
    $region3: #{tpu_custom_call.1} parent=1 // pred_check_branch
      %11 = sbr.rel (0) target = $region5
    $region4: #{tpu_custom_call.1} parent=1 // pred_region
      _
    $region5: #{tpu_custom_call.1} parent=1 // pred_fallthru
      _
    // Predicated region
    $region6: #{tpu_custom_call.1} parent=1 // pred_check
      _
    $region7: #{tpu_custom_call.1} parent=1 // pred_check_branch
      %13 = sbr.rel (0) target = $region9
    $region8: #{tpu_custom_call.1} parent=1 // pred_region
      %s15 = ssub.s32 16384, 16384
      %16 = vsyncadd [#allocation4], %s15
      %s17 = sshll.u32 [#allocation3], 4
      %s18 = int_to_ptr.vmem [resolvable:$true] %s17
      %23 = dma.hbm_to_vmem [thread:$0]  %s1, 16384, %s18, [#allocation4], 1024, 1024, 64
    $region9: #{tpu_custom_call.1} parent=1 // pred_fallthru
      _
    // Predicated region
    $region10: #{tpu_custom_call.1} parent=1 // pred_check
      _
    $region11: #{tpu_custom_call.1} parent=1 // pred_check_branch
      %25 = sbr.rel (0) target = $region13
    $region12: #{tpu_custom_call.1} parent=1 // pred_region
      %26 = dma.done [#allocation4], 16384
    $region13: #{tpu_custom_call.1} parent=1 // pred_fallthru
      _
    %s27 = sld [smem:[#allocation2]]
    %v28 = vld [vmem:[#allocation3] sm:$0xff]
    %v29 = vld [vmem:[#allocation3 + $0x8] sm:$0xff]
    %v30 = vld [vmem:[#allocation3 + $0x10] sm:$0xff]
    %v31 = vld [vmem:[#allocation3 + $0x18] sm:$0xff]
    %v32 = vld [vmem:[#allocation3 + $0x20] sm:$0xff]
    %v33 = vld [vmem:[#allocation3 + $0x28] sm:$0xff]
    %v34 = vld [vmem:[#allocation3 + $0x30] sm:$0xff]
    %v35 = vld [vmem:[#allocation3 + $0x38] sm:$0xff]
    %v36 = vld [vmem:[#allocation3 + $0x40] sm:$0xff]
    %v37 = vld [vmem:[#allocation3 + $0x48] sm:$0xff]
    %v38 = vld [vmem:[#allocation3 + $0x50] sm:$0xff]
    %v39 = vld [vmem:[#allocation3 + $0x58] sm:$0xff]
    %v40 = vld [vmem:[#allocation3 + $0x60] sm:$0xff]
    %v41 = vld [vmem:[#allocation3 + $0x68] sm:$0xff]
    %v42 = vld [vmem:[#allocation3 + $0x70] sm:$0xff]
    %v43 = vld [vmem:[#allocation3 + $0x78] sm:$0xff]
    %v44 = vld [vmem:[#allocation3 + $0x80] sm:$0xff]
    %v45 = vld [vmem:[#allocation3 + $0x88] sm:$0xff]
    %v46 = vld [vmem:[#allocation3 + $0x90] sm:$0xff]
    %v47 = vld [vmem:[#allocation3 + $0x98] sm:$0xff]
    %v48 = vld [vmem:[#allocation3 + $0xa0] sm:$0xff]
    %v49 = vld [vmem:[#allocation3 + $0xa8] sm:$0xff]
    %v50 = vld [vmem:[#allocation3 + $0xb0] sm:$0xff]
    %v51 = vld [vmem:[#allocation3 + $0xb8] sm:$0xff]
    %v52 = vld [vmem:[#allocation3 + $0xc0] sm:$0xff]
    %v53 = vld [vmem:[#allocation3 + $0xc8] sm:$0xff]
    %v54 = vld [vmem:[#allocation3 + $0xd0] sm:$0xff]
    %v55 = vld [vmem:[#allocation3 + $0xd8] sm:$0xff]
    %v56 = vld [vmem:[#allocation3 + $0xe0] sm:$0xff]
    %v57 = vld [vmem:[#allocation3 + $0xe8] sm:$0xff]
    %v58 = vld [vmem:[#allocation3 + $0xf0] sm:$0xff]
    %v59 = vld [vmem:[#allocation3 + $0xf8] sm:$0xff]
    %v60 = vld [vmem:[#allocation3 + $0x100] sm:$0xff]
    %v61 = vld [vmem:[#allocation3 + $0x108] sm:$0xff]
    %v62 = vld [vmem:[#allocation3 + $0x110] sm:$0xff]
    %v63 = vld [vmem:[#allocation3 + $0x118] sm:$0xff]
    %v64 = vld [vmem:[#allocation3 + $0x120] sm:$0xff]
    %v65 = vld [vmem:[#allocation3 + $0x128] sm:$0xff]
    %v66 = vld [vmem:[#allocation3 + $0x130] sm:$0xff]
    %v67 = vld [vmem:[#allocation3 + $0x138] sm:$0xff]
    %v68 = vld [vmem:[#allocation3 + $0x140] sm:$0xff]
    %v69 = vld [vmem:[#allocation3 + $0x148] sm:$0xff]
    %v70 = vld [vmem:[#allocation3 + $0x150] sm:$0xff]
    %v71 = vld [vmem:[#allocation3 + $0x158] sm:$0xff]
    %v72 = vld [vmem:[#allocation3 + $0x160] sm:$0xff]
    %v73 = vld [vmem:[#allocation3 + $0x168] sm:$0xff]
    %v74 = vld [vmem:[#allocation3 + $0x170] sm:$0xff]
    %v75 = vld [vmem:[#allocation3 + $0x178] sm:$0xff]
    %v76 = vld [vmem:[#allocation3 + $0x180] sm:$0xff]
    %v77 = vld [vmem:[#allocation3 + $0x188] sm:$0xff]
    %v78 = vld [vmem:[#allocation3 + $0x190] sm:$0xff]
    %v79 = vld [vmem:[#allocation3 + $0x198] sm:$0xff]
    %v80 = vld [vmem:[#allocation3 + $0x1a0] sm:$0xff]
    %v81 = vld [vmem:[#allocation3 + $0x1a8] sm:$0xff]
    %v82 = vld [vmem:[#allocation3 + $0x1b0] sm:$0xff]
    %v83 = vld [vmem:[#allocation3 + $0x1b8] sm:$0xff]
    %v84 = vld [vmem:[#allocation3 + $0x1c0] sm:$0xff]
    %v85 = vld [vmem:[#allocation3 + $0x1c8] sm:$0xff]
    %v86 = vld [vmem:[#allocation3 + $0x1d0] sm:$0xff]
    %v87 = vld [vmem:[#allocation3 + $0x1d8] sm:$0xff]
    %v88 = vld [vmem:[#allocation3 + $0x1e0] sm:$0xff]
    %v89 = vld [vmem:[#allocation3 + $0x1e8] sm:$0xff]
    %v90 = vld [vmem:[#allocation3 + $0x1f0] sm:$0xff]
    %v91 = vld [vmem:[#allocation3 + $0x1f8] sm:$0xff]
    %v92 = vld [vmem:[#allocation3 + $0x200] sm:$0xff]
    %v93 = vld [vmem:[#allocation3 + $0x208] sm:$0xff]
    %v94 = vld [vmem:[#allocation3 + $0x210] sm:$0xff]
    %v95 = vld [vmem:[#allocation3 + $0x218] sm:$0xff]
    %v96 = vld [vmem:[#allocation3 + $0x220] sm:$0xff]
    %v97 = vld [vmem:[#allocation3 + $0x228] sm:$0xff]
    %v98 = vld [vmem:[#allocation3 + $0x230] sm:$0xff]
    %v99 = vld [vmem:[#allocation3 + $0x238] sm:$0xff]
    %v100 = vld [vmem:[#allocation3 + $0x240] sm:$0xff]
    %v101 = vld [vmem:[#allocation3 + $0x248] sm:$0xff]
    %v102 = vld [vmem:[#allocation3 + $0x250] sm:$0xff]
    %v103 = vld [vmem:[#allocation3 + $0x258] sm:$0xff]
    %v104 = vld [vmem:[#allocation3 + $0x260] sm:$0xff]
    %v105 = vld [vmem:[#allocation3 + $0x268] sm:$0xff]
    %v106 = vld [vmem:[#allocation3 + $0x270] sm:$0xff]
    %v107 = vld [vmem:[#allocation3 + $0x278] sm:$0xff]
    %v108 = vld [vmem:[#allocation3 + $0x280] sm:$0xff]
    %v109 = vld [vmem:[#allocation3 + $0x288] sm:$0xff]
    %v110 = vld [vmem:[#allocation3 + $0x290] sm:$0xff]
    %v111 = vld [vmem:[#allocation3 + $0x298] sm:$0xff]
    %v112 = vld [vmem:[#allocation3 + $0x2a0] sm:$0xff]
    %v113 = vld [vmem:[#allocation3 + $0x2a8] sm:$0xff]
    %v114 = vld [vmem:[#allocation3 + $0x2b0] sm:$0xff]
    %v115 = vld [vmem:[#allocation3 + $0x2b8] sm:$0xff]
    %v116 = vld [vmem:[#allocation3 + $0x2c0] sm:$0xff]
    %v117 = vld [vmem:[#allocation3 + $0x2c8] sm:$0xff]
    %v118 = vld [vmem:[#allocation3 + $0x2d0] sm:$0xff]
    %v119 = vld [vmem:[#allocation3 + $0x2d8] sm:$0xff]
    %v120 = vld [vmem:[#allocation3 + $0x2e0] sm:$0xff]
    %v121 = vld [vmem:[#allocation3 + $0x2e8] sm:$0xff]
    %v122 = vld [vmem:[#allocation3 + $0x2f0] sm:$0xff]
    %v123 = vld [vmem:[#allocation3 + $0x2f8] sm:$0xff]
    %v124 = vld [vmem:[#allocation3 + $0x300] sm:$0xff]
    %v125 = vld [vmem:[#allocation3 + $0x308] sm:$0xff]
    %v126 = vld [vmem:[#allocation3 + $0x310] sm:$0xff]
    %v127 = vld [vmem:[#allocation3 + $0x318] sm:$0xff]
    %v128 = vld [vmem:[#allocation3 + $0x320] sm:$0xff]
    %v129 = vld [vmem:[#allocation3 + $0x328] sm:$0xff]
    %v130 = vld [vmem:[#allocation3 + $0x330] sm:$0xff]
    %v131 = vld [vmem:[#allocation3 + $0x338] sm:$0xff]
    %v132 = vld [vmem:[#allocation3 + $0x340] sm:$0xff]
    %v133 = vld [vmem:[#allocation3 + $0x348] sm:$0xff]
    %v134 = vld [vmem:[#allocation3 + $0x350] sm:$0xff]
    %v135 = vld [vmem:[#allocation3 + $0x358] sm:$0xff]
    %v136 = vld [vmem:[#allocation3 + $0x360] sm:$0xff]
    %v137 = vld [vmem:[#allocation3 + $0x368] sm:$0xff]
    %v138 = vld [vmem:[#allocation3 + $0x370] sm:$0xff]
    %v139 = vld [vmem:[#allocation3 + $0x378] sm:$0xff]
    %v140 = vld [vmem:[#allocation3 + $0x380] sm:$0xff]
    %v141 = vld [vmem:[#allocation3 + $0x388] sm:$0xff]
    %v142 = vld [vmem:[#allocation3 + $0x390] sm:$0xff]
    %v143 = vld [vmem:[#allocation3 + $0x398] sm:$0xff]
    %v144 = vld [vmem:[#allocation3 + $0x3a0] sm:$0xff]
    %v145 = vld [vmem:[#allocation3 + $0x3a8] sm:$0xff]
    %v146 = vld [vmem:[#allocation3 + $0x3b0] sm:$0xff]
    %v147 = vld [vmem:[#allocation3 + $0x3b8] sm:$0xff]
    %v148 = vld [vmem:[#allocation3 + $0x3c0] sm:$0xff]
    %v149 = vld [vmem:[#allocation3 + $0x3c8] sm:$0xff]
    %v150 = vld [vmem:[#allocation3 + $0x3d0] sm:$0xff]
    %v151 = vld [vmem:[#allocation3 + $0x3d8] sm:$0xff]
    %v152 = vld [vmem:[#allocation3 + $0x3e0] sm:$0xff]
    %v153 = vld [vmem:[#allocation3 + $0x3e8] sm:$0xff]
    %v154 = vld [vmem:[#allocation3 + $0x3f0] sm:$0xff]
    %v155 = vld [vmem:[#allocation3 + $0x3f8] sm:$0xff]
    %v156 = vstv %s27
    %v157 = vmul.f32 %v28, %v156
    %v158 = vmul.f32 %v29, %v156
    %v159 = vmul.f32 %v30, %v156
    %v160 = vmul.f32 %v31, %v156
    %v161 = vmul.f32 %v32, %v156
    %v162 = vmul.f32 %v33, %v156
    %v163 = vmul.f32 %v34, %v156
    %v164 = vmul.f32 %v35, %v156
    %v165 = vmul.f32 %v36, %v156
    %v166 = vmul.f32 %v37, %v156
    %v167 = vmul.f32 %v38, %v156
    %v168 = vmul.f32 %v39, %v156
    %v169 = vmul.f32 %v40, %v156
    %v170 = vmul.f32 %v41, %v156
    %v171 = vmul.f32 %v42, %v156
    %v172 = vmul.f32 %v43, %v156
    %v173 = vmul.f32 %v44, %v156
    %v174 = vmul.f32 %v45, %v156
    %v175 = vmul.f32 %v46, %v156
    %v176 = vmul.f32 %v47, %v156
    %v177 = vmul.f32 %v48, %v156
    %v178 = vmul.f32 %v49, %v156
    %v179 = vmul.f32 %v50, %v156
    %v180 = vmul.f32 %v51, %v156
    %v181 = vmul.f32 %v52, %v156
    %v182 = vmul.f32 %v53, %v156
    %v183 = vmul.f32 %v54, %v156
    %v184 = vmul.f32 %v55, %v156
    %v185 = vmul.f32 %v56, %v156
    %v186 = vmul.f32 %v57, %v156
    %v187 = vmul.f32 %v58, %v156
    %v188 = vmul.f32 %v59, %v156
    %v189 = vmul.f32 %v60, %v156
    %v190 = vmul.f32 %v61, %v156
    %v191 = vmul.f32 %v62, %v156
    %v192 = vmul.f32 %v63, %v156
    %v193 = vmul.f32 %v64, %v156
    %v194 = vmul.f32 %v65, %v156
    %v195 = vmul.f32 %v66, %v156
    %v196 = vmul.f32 %v67, %v156
    %v197 = vmul.f32 %v68, %v156
    %v198 = vmul.f32 %v69, %v156
    %v199 = vmul.f32 %v70, %v156
    %v200 = vmul.f32 %v71, %v156
    %v201 = vmul.f32 %v72, %v156
    %v202 = vmul.f32 %v73, %v156
    %v203 = vmul.f32 %v74, %v156
    %v204 = vmul.f32 %v75, %v156
    %v205 = vmul.f32 %v76, %v156
    %v206 = vmul.f32 %v77, %v156
    %v207 = vmul.f32 %v78, %v156
    %v208 = vmul.f32 %v79, %v156
    %v209 = vmul.f32 %v80, %v156
    %v210 = vmul.f32 %v81, %v156
    %v211 = vmul.f32 %v82, %v156
    %v212 = vmul.f32 %v83, %v156
    %v213 = vmul.f32 %v84, %v156
    %v214 = vmul.f32 %v85, %v156
    %v215 = vmul.f32 %v86, %v156
    %v216 = vmul.f32 %v87, %v156
    %v217 = vmul.f32 %v88, %v156
    %v218 = vmul.f32 %v89, %v156
    %v219 = vmul.f32 %v90, %v156
    %v220 = vmul.f32 %v91, %v156
    %v221 = vmul.f32 %v92, %v156
    %v222 = vmul.f32 %v93, %v156
    %v223 = vmul.f32 %v94, %v156
    %v224 = vmul.f32 %v95, %v156
    %v225 = vmul.f32 %v96, %v156
    %v226 = vmul.f32 %v97, %v156
    %v227 = vmul.f32 %v98, %v156
    %v228 = vmul.f32 %v99, %v156
    %v229 = vmul.f32 %v100, %v156
    %v230 = vmul.f32 %v101, %v156
    %v231 = vmul.f32 %v102, %v156
    %v232 = vmul.f32 %v103, %v156
    %v233 = vmul.f32 %v104, %v156
    %v234 = vmul.f32 %v105, %v156
    %v235 = vmul.f32 %v106, %v156
    %v236 = vmul.f32 %v107, %v156
    %v237 = vmul.f32 %v108, %v156
    %v238 = vmul.f32 %v109, %v156
    %v239 = vmul.f32 %v110, %v156
    %v240 = vmul.f32 %v111, %v156
    %v241 = vmul.f32 %v112, %v156
    %v242 = vmul.f32 %v113, %v156
    %v243 = vmul.f32 %v114, %v156
    %v244 = vmul.f32 %v115, %v156
    %v245 = vmul.f32 %v116, %v156
    %v246 = vmul.f32 %v117, %v156
    %v247 = vmul.f32 %v118, %v156
    %v248 = vmul.f32 %v119, %v156
    %v249 = vmul.f32 %v120, %v156
    %v250 = vmul.f32 %v121, %v156
    %v251 = vmul.f32 %v122, %v156
    %v252 = vmul.f32 %v123, %v156
    %v253 = vmul.f32 %v124, %v156
    %v254 = vmul.f32 %v125, %v156
    %v255 = vmul.f32 %v126, %v156
    %v256 = vmul.f32 %v127, %v156
    %v257 = vmul.f32 %v128, %v156
    %v258 = vmul.f32 %v129, %v156
    %v259 = vmul.f32 %v130, %v156
    %v260 = vmul.f32 %v131, %v156
    %v261 = vmul.f32 %v132, %v156
    %v262 = vmul.f32 %v133, %v156
    %v263 = vmul.f32 %v134, %v156
    %v264 = vmul.f32 %v135, %v156
    %v265 = vmul.f32 %v136, %v156
    %v266 = vmul.f32 %v137, %v156
    %v267 = vmul.f32 %v138, %v156
    %v268 = vmul.f32 %v139, %v156
    %v269 = vmul.f32 %v140, %v156
    %v270 = vmul.f32 %v141, %v156
    %v271 = vmul.f32 %v142, %v156
    %v272 = vmul.f32 %v143, %v156
    %v273 = vmul.f32 %v144, %v156
    %v274 = vmul.f32 %v145, %v156
    %v275 = vmul.f32 %v146, %v156
    %v276 = vmul.f32 %v147, %v156
    %v277 = vmul.f32 %v148, %v156
    %v278 = vmul.f32 %v149, %v156
    %v279 = vmul.f32 %v150, %v156
    %v280 = vmul.f32 %v151, %v156
    %v281 = vmul.f32 %v152, %v156
    %v282 = vmul.f32 %v153, %v156
    %v283 = vmul.f32 %v154, %v156
    %v284 = vmul.f32 %v155, %v156
    %285 = vst [vmem:[#allocation6] sm:$0xff] %v157
    %286 = vst [vmem:[#allocation6 + $0x8] sm:$0xff] %v158
    %287 = vst [vmem:[#allocation6 + $0x10] sm:$0xff] %v159
    %288 = vst [vmem:[#allocation6 + $0x18] sm:$0xff] %v160
    %289 = vst [vmem:[#allocation6 + $0x20] sm:$0xff] %v161
    %290 = vst [vmem:[#allocation6 + $0x28] sm:$0xff] %v162
    %291 = vst [vmem:[#allocation6 + $0x30] sm:$0xff] %v163
    %292 = vst [vmem:[#allocation6 + $0x38] sm:$0xff] %v164
    %293 = vst [vmem:[#allocation6 + $0x40] sm:$0xff] %v165
    %294 = vst [vmem:[#allocation6 + $0x48] sm:$0xff] %v166
    %295 = vst [vmem:[#allocation6 + $0x50] sm:$0xff] %v167
    %296 = vst [vmem:[#allocation6 + $0x58] sm:$0xff] %v168
    %297 = vst [vmem:[#allocation6 + $0x60] sm:$0xff] %v169
    %298 = vst [vmem:[#allocation6 + $0x68] sm:$0xff] %v170
    %299 = vst [vmem:[#allocation6 + $0x70] sm:$0xff] %v171
    %300 = vst [vmem:[#allocation6 + $0x78] sm:$0xff] %v172
    %301 = vst [vmem:[#allocation6 + $0x80] sm:$0xff] %v173
    %302 = vst [vmem:[#allocation6 + $0x88] sm:$0xff] %v174
    %303 = vst [vmem:[#allocation6 + $0x90] sm:$0xff] %v175
    %304 = vst [vmem:[#allocation6 + $0x98] sm:$0xff] %v176
    %305 = vst [vmem:[#allocation6 + $0xa0] sm:$0xff] %v177
    %306 = vst [vmem:[#allocation6 + $0xa8] sm:$0xff] %v178
    %307 = vst [vmem:[#allocation6 + $0xb0] sm:$0xff] %v179
    %308 = vst [vmem:[#allocation6 + $0xb8] sm:$0xff] %v180
    %309 = vst [vmem:[#allocation6 + $0xc0] sm:$0xff] %v181
    %310 = vst [vmem:[#allocation6 + $0xc8] sm:$0xff] %v182
    %311 = vst [vmem:[#allocation6 + $0xd0] sm:$0xff] %v183
    %312 = vst [vmem:[#allocation6 + $0xd8] sm:$0xff] %v184
    %313 = vst [vmem:[#allocation6 + $0xe0] sm:$0xff] %v185
    %314 = vst [vmem:[#allocation6 + $0xe8] sm:$0xff] %v186
    %315 = vst [vmem:[#allocation6 + $0xf0] sm:$0xff] %v187
    %316 = vst [vmem:[#allocation6 + $0xf8] sm:$0xff] %v188
    %317 = vst [vmem:[#allocation6 + $0x100] sm:$0xff] %v189
    %318 = vst [vmem:[#allocation6 + $0x108] sm:$0xff] %v190
    %319 = vst [vmem:[#allocation6 + $0x110] sm:$0xff] %v191
    %320 = vst [vmem:[#allocation6 + $0x118] sm:$0xff] %v192
    %321 = vst [vmem:[#allocation6 + $0x120] sm:$0xff] %v193
    %322 = vst [vmem:[#allocation6 + $0x128] sm:$0xff] %v194
    %323 = vst [vmem:[#allocation6 + $0x130] sm:$0xff] %v195
    %324 = vst [vmem:[#allocation6 + $0x138] sm:$0xff] %v196
    %325 = vst [vmem:[#allocation6 + $0x140] sm:$0xff] %v197
    %326 = vst [vmem:[#allocation6 + $0x148] sm:$0xff] %v198
    %327 = vst [vmem:[#allocation6 + $0x150] sm:$0xff] %v199
    %328 = vst [vmem:[#allocation6 + $0x158] sm:$0xff] %v200
    %329 = vst [vmem:[#allocation6 + $0x160] sm:$0xff] %v201
    %330 = vst [vmem:[#allocation6 + $0x168] sm:$0xff] %v202
    %331 = vst [vmem:[#allocation6 + $0x170] sm:$0xff] %v203
    %332 = vst [vmem:[#allocation6 + $0x178] sm:$0xff] %v204
    %333 = vst [vmem:[#allocation6 + $0x180] sm:$0xff] %v205
    %334 = vst [vmem:[#allocation6 + $0x188] sm:$0xff] %v206
    %335 = vst [vmem:[#allocation6 + $0x190] sm:$0xff] %v207
    %336 = vst [vmem:[#allocation6 + $0x198] sm:$0xff] %v208
    %337 = vst [vmem:[#allocation6 + $0x1a0] sm:$0xff] %v209
    %338 = vst [vmem:[#allocation6 + $0x1a8] sm:$0xff] %v210
    %339 = vst [vmem:[#allocation6 + $0x1b0] sm:$0xff] %v211
    %340 = vst [vmem:[#allocation6 + $0x1b8] sm:$0xff] %v212
    %341 = vst [vmem:[#allocation6 + $0x1c0] sm:$0xff] %v213
    %342 = vst [vmem:[#allocation6 + $0x1c8] sm:$0xff] %v214
    %343 = vst [vmem:[#allocation6 + $0x1d0] sm:$0xff] %v215
    %344 = vst [vmem:[#allocation6 + $0x1d8] sm:$0xff] %v216
    %345 = vst [vmem:[#allocation6 + $0x1e0] sm:$0xff] %v217
    %346 = vst [vmem:[#allocation6 + $0x1e8] sm:$0xff] %v218
    %347 = vst [vmem:[#allocation6 + $0x1f0] sm:$0xff] %v219
    %348 = vst [vmem:[#allocation6 + $0x1f8] sm:$0xff] %v220
    %349 = vst [vmem:[#allocation6 + $0x200] sm:$0xff] %v221
    %350 = vst [vmem:[#allocation6 + $0x208] sm:$0xff] %v222
    %351 = vst [vmem:[#allocation6 + $0x210] sm:$0xff] %v223
    %352 = vst [vmem:[#allocation6 + $0x218] sm:$0xff] %v224
    %353 = vst [vmem:[#allocation6 + $0x220] sm:$0xff] %v225
    %354 = vst [vmem:[#allocation6 + $0x228] sm:$0xff] %v226
    %355 = vst [vmem:[#allocation6 + $0x230] sm:$0xff] %v227
    %356 = vst [vmem:[#allocation6 + $0x238] sm:$0xff] %v228
    %357 = vst [vmem:[#allocation6 + $0x240] sm:$0xff] %v229
    %358 = vst [vmem:[#allocation6 + $0x248] sm:$0xff] %v230
    %359 = vst [vmem:[#allocation6 + $0x250] sm:$0xff] %v231
    %360 = vst [vmem:[#allocation6 + $0x258] sm:$0xff] %v232
    %361 = vst [vmem:[#allocation6 + $0x260] sm:$0xff] %v233
    %362 = vst [vmem:[#allocation6 + $0x268] sm:$0xff] %v234
    %363 = vst [vmem:[#allocation6 + $0x270] sm:$0xff] %v235
    %364 = vst [vmem:[#allocation6 + $0x278] sm:$0xff] %v236
    %365 = vst [vmem:[#allocation6 + $0x280] sm:$0xff] %v237
    %366 = vst [vmem:[#allocation6 + $0x288] sm:$0xff] %v238
    %367 = vst [vmem:[#allocation6 + $0x290] sm:$0xff] %v239
    %368 = vst [vmem:[#allocation6 + $0x298] sm:$0xff] %v240
    %369 = vst [vmem:[#allocation6 + $0x2a0] sm:$0xff] %v241
    %370 = vst [vmem:[#allocation6 + $0x2a8] sm:$0xff] %v242
    %371 = vst [vmem:[#allocation6 + $0x2b0] sm:$0xff] %v243
    %372 = vst [vmem:[#allocation6 + $0x2b8] sm:$0xff] %v244
    %373 = vst [vmem:[#allocation6 + $0x2c0] sm:$0xff] %v245
    %374 = vst [vmem:[#allocation6 + $0x2c8] sm:$0xff] %v246
    %375 = vst [vmem:[#allocation6 + $0x2d0] sm:$0xff] %v247
    %376 = vst [vmem:[#allocation6 + $0x2d8] sm:$0xff] %v248
    %377 = vst [vmem:[#allocation6 + $0x2e0] sm:$0xff] %v249
    %378 = vst [vmem:[#allocation6 + $0x2e8] sm:$0xff] %v250
    %379 = vst [vmem:[#allocation6 + $0x2f0] sm:$0xff] %v251
    %380 = vst [vmem:[#allocation6 + $0x2f8] sm:$0xff] %v252
    %381 = vst [vmem:[#allocation6 + $0x300] sm:$0xff] %v253
    %382 = vst [vmem:[#allocation6 + $0x308] sm:$0xff] %v254
    %383 = vst [vmem:[#allocation6 + $0x310] sm:$0xff] %v255
    %384 = vst [vmem:[#allocation6 + $0x318] sm:$0xff] %v256
    %385 = vst [vmem:[#allocation6 + $0x320] sm:$0xff] %v257
    %386 = vst [vmem:[#allocation6 + $0x328] sm:$0xff] %v258
    %387 = vst [vmem:[#allocation6 + $0x330] sm:$0xff] %v259
    %388 = vst [vmem:[#allocation6 + $0x338] sm:$0xff] %v260
    %389 = vst [vmem:[#allocation6 + $0x340] sm:$0xff] %v261
    %390 = vst [vmem:[#allocation6 + $0x348] sm:$0xff] %v262
    %391 = vst [vmem:[#allocation6 + $0x350] sm:$0xff] %v263
    %392 = vst [vmem:[#allocation6 + $0x358] sm:$0xff] %v264
    %393 = vst [vmem:[#allocation6 + $0x360] sm:$0xff] %v265
    %394 = vst [vmem:[#allocation6 + $0x368] sm:$0xff] %v266
    %395 = vst [vmem:[#allocation6 + $0x370] sm:$0xff] %v267
    %396 = vst [vmem:[#allocation6 + $0x378] sm:$0xff] %v268
    %397 = vst [vmem:[#allocation6 + $0x380] sm:$0xff] %v269
    %398 = vst [vmem:[#allocation6 + $0x388] sm:$0xff] %v270
    %399 = vst [vmem:[#allocation6 + $0x390] sm:$0xff] %v271
    %400 = vst [vmem:[#allocation6 + $0x398] sm:$0xff] %v272
    %401 = vst [vmem:[#allocation6 + $0x3a0] sm:$0xff] %v273
    %402 = vst [vmem:[#allocation6 + $0x3a8] sm:$0xff] %v274
    %403 = vst [vmem:[#allocation6 + $0x3b0] sm:$0xff] %v275
    %404 = vst [vmem:[#allocation6 + $0x3b8] sm:$0xff] %v276
    %405 = vst [vmem:[#allocation6 + $0x3c0] sm:$0xff] %v277
    %406 = vst [vmem:[#allocation6 + $0x3c8] sm:$0xff] %v278
    %407 = vst [vmem:[#allocation6 + $0x3d0] sm:$0xff] %v279
    %408 = vst [vmem:[#allocation6 + $0x3d8] sm:$0xff] %v280
    %409 = vst [vmem:[#allocation6 + $0x3e0] sm:$0xff] %v281
    %410 = vst [vmem:[#allocation6 + $0x3e8] sm:$0xff] %v282
    %411 = vst [vmem:[#allocation6 + $0x3f0] sm:$0xff] %v283
    %412 = vst [vmem:[#allocation6 + $0x3f8] sm:$0xff] %v284
    // Predicated region
    $region14: #{tpu_custom_call.1} parent=1 // pred_check
      _
    $region15: #{tpu_custom_call.1} parent=1 // pred_check_branch
      %414 = sbr.rel (0) target = $region17
    $region16: #{tpu_custom_call.1} parent=1 // pred_region
      %s416 = ssub.s32 16384, 16384
      %417 = vsyncadd [#allocation5], %s416
      %s418 = sshll.u32 [#allocation6], 4
      %s419 = int_to_ptr.vmem [resolvable:$true] %s418
      %424 = dma.vmem_to_hbm [thread:$0]  %s419, 16384, %s2, [#allocation5], 1024, 1024, 64
    $region17: #{tpu_custom_call.1} parent=1 // pred_fallthru
      _
    // Predicated region
    $region18: #{tpu_custom_call.1} parent=1 // pred_check
      _
    $region19: #{tpu_custom_call.1} parent=1 // pred_check_branch
      %426 = sbr.rel (0) target = $region21
    $region20: #{tpu_custom_call.1} parent=1 // pred_region
      %427 = dma.done [#allocation5], 16384
    $region21: #{tpu_custom_call.1} parent=1 // pred_fallthru
      _
    %428 = vsyncpa [#allocation4], 1
    %429 = vsyncpa [#allocation5], 1

</llo_original>
